<compile_context>
chip_gen: v5e
topology: v5e:2x2
jax: 0.10.0
libtpu: 0.0.40
codegen_flags: <defaults>
</compile_context>

<pallas_src>
import functools

import jax
import jax.numpy as jnp
from jax import lax
from jax.experimental import pallas as pl
from jax.experimental.pallas import tpu as pltpu


def _round_up(x, m):
    return (x + m - 1) // m * m


def _sublane(itemsize):
    # sublane tile height per dtype width (f32: 8, bf16: 16, int8: 32)
    return {4: 8, 2: 16, 1: 32}.get(itemsize, 8)


def _focal_dice_kernel(logits_ref, labels_ref, out_ref, *,
                       n_valid, tile_s, chunk, num_chunks, tiles_per_p,
                       split_spatial, any_masked_tiles):
    """Per-(batch-or-split-row, spatial-tile) partial sums.

    logits_ref: (1, C, tile_s) native dtype
    labels_ref: (1, 1, tile_s) int32
    out_ref:    (1, C, 2) f32  — lane 0: intersect, lane 1: z_sum + y_sum (merged)
    """
    p_idx = pl.program_id(0)
    s_idx = pl.program_id(1)
    C = logits_ref.shape[1]

    global_tile = p_idx * tiles_per_p + s_idx if split_spatial else s_idx

    @pl.when(s_idx == 0)
    def _():
        out_ref[...] = jnp.zeros_like(out_ref)

    def accumulate(masked):
        def step(j, carry):
            acc_i, acc_zy = carry
            off = pl.multiple_of(j * chunk, chunk)
            x = logits_ref[0, :, pl.ds(off, chunk)].astype(jnp.float32)   # (C, chunk)
            lab = labels_ref[0, :, pl.ds(off, chunk)]                     # (1, chunk)

            # Softmax over the class (sublane) axis: XLU reductions — VPU/vst are binding.
            m = jnp.max(x, axis=0, keepdims=True)
            e = jnp.exp(x - m)
            denom = jnp.sum(e, axis=0, keepdims=True)
            # EUP approximate reciprocal + one Newton step (~f32 accurate; keep the step —
            # the approx bias would otherwise accumulate over millions of pixels).
            inv = pl.reciprocal(denom, approx=True)
            inv = inv * (2.0 - denom * inv)
            prob = e * inv                                                # (C, chunk)

            cls = lax.broadcasted_iota(jnp.int32, (C, chunk), 0)
            onehot = lab == cls                                           # (C, chunk) bool
            if masked:
                col = (lax.broadcasted_iota(jnp.int32, (1, chunk), 1)
                       + global_tile * tile_s + off)
                valid = col < n_valid
                onehot = onehot & valid
                prob = jnp.where(valid, prob, 0.0)   # mask before squaring (NaN-safe)

            acc_i = acc_i + jnp.where(onehot, prob, 0.0)                  # intersect
            acc_zy = acc_zy + (prob * prob + onehot.astype(jnp.float32))  # z_sum + y_sum
            return acc_i, acc_zy

        zeros = jnp.zeros((C, chunk), jnp.float32)
        acc_i, acc_zy = lax.fori_loop(0, num_chunks, step, (zeros, zeros))
        # One lane reduction + one tiny (C, 2) RMW per big spatial tile.
        out_ref[0, :, 0:1] += jnp.sum(acc_i, axis=-1, keepdims=True)
        out_ref[0, :, 1:2] += jnp.sum(acc_zy, axis=-1, keepdims=True)

    if any_masked_tiles:
        # Only tiles whose lane range overhangs S pay the mask (last / phantom tiles).
        needs_mask = (global_tile + 1) * tile_s > n_valid

        @pl.when(needs_mask)
        def _():
            accumulate(masked=True)

        @pl.when(jnp.logical_not(needs_mask))
        def _():
            accumulate(masked=False)
    else:
        accumulate(masked=False)


def _pick_tile_s(S, C, itemsize, chunk, vmem_budget_bytes):
    """Largest chunk-aligned lane tile whose double-buffered input DMAs fit the budget.

    Accounts for sublane padding: logits C rows pad to the dtype sublane tile, the int32
    labels (1, T) block pads to 8 sublanes.  Accumulators are vreg-resident (no scratch).
    """
    per_col = 2 * (_round_up(C, _sublane(itemsize)) * itemsize + 8 * 4)
    tile = (vmem_budget_bytes // per_col) // chunk * chunk
    cap = max(chunk, (32768 // chunk) * chunk)
    tile = max(chunk, min(tile, cap))
    return min(tile, _round_up(S, chunk))


def focal_dice_loss(logits_nchw, target_nhw, n_classes, beta=2.0, weight=None,
                    tile_s=None, chunk=512, vmem_budget_bytes=8 * 1024 * 1024):
    """Pallas implementation of FocalDiceLoss.forward(inputs, target, softmax=True)."""
    N, C, H, W = logits_nchw.shape
    assert C == n_classes
    S = H * W

    # Native NCHW layout: pure reshape (classes -> sublanes, pixels -> lanes).
    x = logits_nchw.reshape(N, C, S)
    # TODO(synk): labels could be stored int8 in HBM (~15-25% less traffic on this
    # memory-bound kernel); kept int32 here to avoid narrow-dtype DMA lowering risk.
    labels = target_nhw.reshape(N, 1, S).astype(jnp.int32)

    itemsize = jnp.dtype(x.dtype).itemsize
    chunk = _round_up(max(128, min(int(chunk), _round_up(S, 128))), 128)
    if tile_s is None:
        tile_s = _pick_tile_s(S, C, itemsize, chunk, vmem_budget_bytes)
    else:
        tile_s = max(chunk, _round_up(int(tile_s), chunk))
    num_chunks = tile_s // chunk
    num_tiles = pl.cdiv(S, tile_s)

    # Megacore fallback (v7x): with one batch row, split the spatial reduction across a
    # leading size-2 "parallel" axis so both TensorCores get work.  Phantom tiles (odd tile
    # count) are clamped in the index_map and fully lane-masked inside the kernel.
    split_spatial = (N == 1 and num_tiles > 1)
    if split_spatial:
        P = 2
        tiles_per_p = pl.cdiv(num_tiles, P)

        def in_idx(p, s):
            t = jnp.minimum(p * tiles_per_p + s, num_tiles - 1)
            return (0, 0, t)

        logits_idx = in_idx
        labels_idx = in_idx
        covered_cols = P * tiles_per_p * tile_s
        grid = (P, tiles_per_p)
    else:
        P = N
        tiles_per_p = num_tiles
        logits_idx = lambda n, s: (n, 0, s)
        labels_idx = lambda n, s: (n, 0, s)
        covered_cols = num_tiles * tile_s
        grid = (P, num_tiles)

    any_masked = covered_cols > S

    # Explicit VMEM limit: double-buffered inputs (with sublane padding) + headroom.
    in_bytes_per_col = _round_up(C, _sublane(itemsize)) * itemsize + 8 * 4
    vmem_needed = 2 * in_bytes_per_col * tile_s
    vmem_limit = int(min(max(vmem_needed + (8 << 20), 12 << 20), 32 << 20))

    kernel = functools.partial(
        _focal_dice_kernel, n_valid=S, tile_s=tile_s, chunk=chunk,
        num_chunks=num_chunks, tiles_per_p=tiles_per_p,
        split_spatial=split_spatial, any_masked_tiles=any_masked)

    partials = pl.pallas_call(
        kernel,
        out_shape=jax.ShapeDtypeStruct((P, C, 2), jnp.float32),
        grid_spec=pltpu.PrefetchScalarGridSpec(
            num_scalar_prefetch=0,
            grid=grid,
            in_specs=[
                pl.BlockSpec((1, C, tile_s), logits_idx),
                pl.BlockSpec((1, 1, tile_s), labels_idx),
            ],
            out_specs=pl.BlockSpec((1, C, 2), lambda p, s: (p, 0, 0)),
        ),
        compiler_params=pltpu.CompilerParams(
            dimension_semantics=("parallel", "arbitrary"),
            vmem_limit_bytes=vmem_limit),
    )(x, labels)

    # Tiny per-class scalar epilogue in plain JAX.
    sums = jnp.sum(partials, axis=0)          # (C, 2)
    intersect = sums[:, 0]
    zy_sum = sums[:, 1]                       # z_sum + y_sum (merged accumulator)
    smooth = 1.0
    dice = (2.0 * intersect + smooth) / (zy_sum + smooth)
    per_class = 1.0 - dice ** (1.0 / beta)    # module stores self.beta = 1/beta
    if weight is None:
        w = jnp.ones((C,), jnp.float32)
    else:
        w = jnp.asarray(weight, jnp.float32)
    return jnp.sum(per_class * w) / n_classes


def _reference_focal_dice(logits_nchw, target_nhw, n_classes, beta=2.0):
    """Pure-JAX reference mirroring the PyTorch module exactly."""
    p = jax.nn.softmax(logits_nchw.astype(jnp.float32), axis=1)
    smooth = 1.0
    loss = 0.0
    for i in range(n_classes):
        score = p[:, i]
        tgt = (target_nhw == i).astype(jnp.float32)
        intersect = jnp.sum(score * tgt)
        y_sum = jnp.sum(tgt * tgt)
        z_sum = jnp.sum(score * score)
        dice = (2 * intersect + smooth) / (z_sum + y_sum + smooth)
        loss = loss + (1.0 - dice ** (1.0 / beta))
    return loss / n_classes


if __name__ == "__main__":
    key = jax.random.PRNGKey(0)
    n_classes = 4

    # Primary case: N=2, C=4, 16x16 — one full tile per batch row, unmasked fast path.
    N, H, W = 2, 16, 16
    k1, k2, k3, k4 = jax.random.split(key, 4)
    logits = jax.random.normal(k1, (N, n_classes, H, W), dtype=jnp.float32)
    target = jax.random.randint(k2, (N, H, W), 0, n_classes, dtype=jnp.int32)
    loss = jax.block_until_ready(focal_dice_loss(logits, target, n_classes, beta=2.0))
    ref = jax.block_until_ready(
        _reference_focal_dice(logits, target, n_classes, beta=2.0))
    assert jnp.allclose(loss, ref, rtol=1e-4, atol=1e-4), (loss, ref)

    # Ragged / multi-tile / N==1 spatial-split path: 24x24 (S=576) with a forced small
    # tile so the last tile overhangs S and the two split grid rows each take one tile.
    N2, H2, W2 = 1, 24, 24
    logits2 = jax.random.normal(k3, (N2, n_classes, H2, W2), dtype=jnp.float32)
    target2 = jax.random.randint(k4, (N2, H2, W2), 0, n_classes, dtype=jnp.int32)
    loss2 = jax.block_until_ready(
        focal_dice_loss(logits2, target2, n_classes, beta=2.0, tile_s=256))
    ref2 = jax.block_until_ready(
        _reference_focal_dice(logits2, target2, n_classes, beta=2.0))
    assert jnp.allclose(loss2, ref2, rtol=1e-4, atol=1e-4), (loss2, ref2)

    print("KERNEL_OK")
</pallas_src>

<mosaic_0001>
module attributes {stable_mosaic.version = 11 : i64} {
  func.func @_focal_dice_kernel(%arg0: i32, %arg1: i32, %arg2: memref<1x4x256xf32, #tpu.memory_space<vmem>>, %arg3: memref<1x1x256xi32, #tpu.memory_space<vmem>>, %arg4: memref<1x4x2xf32, #tpu.memory_space<vmem>>) attributes {dimension_semantics = [#tpu.dimension_semantics<parallel>, #tpu.dimension_semantics<arbitrary>], iteration_bounds = array<i64: 2, 1>, scalar_prefetch = 0 : i64, scratch_operands = 0 : i64, tpu.core_type = #tpu.core_type<tc>, window_params = [{transform_indices = @transform_0, window_bounds = array<i64: 1, 4, 256>}, {transform_indices = @transform_1, window_bounds = array<i64: 1, 1, 256>}, {transform_indices = @transform_2, window_bounds = array<i64: 1, 4, 2>}]} {
    %c0_i32 = arith.constant 0 : i32
    %0 = arith.cmpi eq, %arg1, %c0_i32 : i32
    %1 = arith.extui %0 : i1 to i32
    %c0_i32_0 = arith.constant 0 : i32
    %2 = arith.cmpi ne, %1, %c0_i32_0 : i32
    scf.if %2 {
      %cst_22 = arith.constant 0.000000e+00 : f32
      %53 = vector.broadcast %cst_22 : f32 to vector<1x4x2xf32>
      %c0_23 = arith.constant 0 : index
      %c0_24 = arith.constant 0 : index
      %c0_25 = arith.constant 0 : index
      %54 = vector.load %arg4[%c0_23, %c0_24, %c0_25] : memref<1x4x2xf32, #tpu.memory_space<vmem>>, vector<1x4x2xf32>
      tpu.vector_store %arg4[%c0_23, %c0_24, %c0_25], %53 {strides = array<i32>} : memref<1x4x2xf32, #tpu.memory_space<vmem>>, vector<1x4x2xf32>,
    } else {
    }
    %cst = arith.constant 0.000000e+00 : f32
    %3 = vector.broadcast %cst : f32 to vector<4x256xf32>
    %c0_i32_1 = arith.constant 0 : i32
    %c256_i32 = arith.constant 256 : i32
    %4 = arith.muli %c0_i32_1, %c256_i32 : i32
    %5 = tpu.assume_multiple %4, 256 : i32
    %c0 = arith.constant 0 : index
    %c0_2 = arith.constant 0 : index
    %6 = arith.index_cast %5 : i32 to index
    %7 = vector.load %arg2[%c0, %c0_2, %6] : memref<1x4x256xf32, #tpu.memory_space<vmem>>, vector<1x4x256xf32>
    %8 = vector.shape_cast %7 : vector<1x4x256xf32> to vector<4x256xf32>
    %c0_3 = arith.constant 0 : index
    %c0_4 = arith.constant 0 : index
    %9 = arith.index_cast %5 : i32 to index
    %10 = vector.load %arg3[%c0_3, %c0_4, %9] : memref<1x1x256xi32, #tpu.memory_space<vmem>>, vector<1x1x256xi32>
    %11 = vector.shape_cast %10 : vector<1x1x256xi32> to vector<1x256xi32>
    %cst_5 = arith.constant dense<0xFF800000> : vector<256xf32>
    %12 = vector.multi_reduction <maximumf>, %8, %cst_5 [0] : vector<4x256xf32> to vector<256xf32>
    %13 = vector.shape_cast %12 : vector<256xf32> to vector<1x256xf32>
    %14 = vector.broadcast %13 : vector<1x256xf32> to vector<4x256xf32>
    %15 = arith.subf %8, %14 : vector<4x256xf32>
    %16 = math.exp %15 : vector<4x256xf32>
    %cst_6 = arith.constant dense<0.000000e+00> : vector<256xf32>
    %17 = vector.multi_reduction <add>, %16, %cst_6 [0] : vector<4x256xf32> to vector<256xf32>
    %18 = vector.shape_cast %17 : vector<256xf32> to vector<1x256xf32>
    %19 = tpu.reciprocal %18 {approx = true} : vector<1x256xf32> -> vector<1x256xf32>
    %20 = arith.mulf %18, %19 : vector<1x256xf32>
    %cst_7 = arith.constant 2.000000e+00 : f32
    %21 = vector.broadcast %cst_7 : f32 to vector<1x256xf32>
    %22 = arith.subf %21, %20 : vector<1x256xf32>
    %23 = arith.mulf %19, %22 : vector<1x256xf32>
    %24 = vector.broadcast %23 : vector<1x256xf32> to vector<4x256xf32>
    %25 = arith.mulf %16, %24 : vector<4x256xf32>
    %26 = tpu.iota {dimensions = array<i32: 0>} : vector<4x256xi32>
    %27 = vector.broadcast %11 : vector<1x256xi32> to vector<4x256xi32>
    %28 = arith.cmpi eq, %27, %26 : vector<4x256xi32>
    %cst_8 = arith.constant 0.000000e+00 : f32
    %29 = vector.broadcast %cst_8 : f32 to vector<4x256xf32>
    %30 = arith.select %28, %25, %29 : vector<4x256xi1>, vector<4x256xf32>
    %31 = arith.addf %3, %30 : vector<4x256xf32>
    %32 = arith.mulf %25, %25 : vector<4x256xf32>
    %33 = arith.extui %28 : vector<4x256xi1> to vector<4x256xi32>
    %34 = arith.sitofp %33 : vector<4x256xi32> to vector<4x256xf32>
    %35 = arith.addf %32, %34 : vector<4x256xf32>
    %36 = arith.addf %3, %35 : vector<4x256xf32>
    %c1_i32 = arith.constant 1 : i32
    %c0_9 = arith.constant 0 : index
    %c0_10 = arith.constant 0 : index
    %c0_11 = arith.constant 0 : index
    %37 = vector.load %arg4[%c0_9, %c0_10, %c0_11] : memref<1x4x2xf32, #tpu.memory_space<vmem>>, vector<1x4x1xf32>
    %38 = vector.shape_cast %37 : vector<1x4x1xf32> to vector<4x1xf32>
    %cst_12 = arith.constant dense<0.000000e+00> : vector<4xf32>
    %39 = vector.multi_reduction <add>, %31, %cst_12 [1] : vector<4x256xf32> to vector<4xf32>
    %40 = vector.shape_cast %39 : vector<4xf32> to vector<4x1xf32>
    %41 = arith.addf %38, %40 : vector<4x1xf32>
    %c0_13 = arith.constant 0 : index
    %c0_14 = arith.constant 0 : index
    %c0_15 = arith.constant 0 : index
    %42 = vector.load %arg4[%c0_13, %c0_14, %c0_15] : memref<1x4x2xf32, #tpu.memory_space<vmem>>, vector<1x4x1xf32>
    %43 = vector.shape_cast %42 : vector<1x4x1xf32> to vector<4x1xf32>
    %44 = vector.shape_cast %41 : vector<4x1xf32> to vector<1x4x1xf32>
    tpu.vector_store %arg4[%c0_13, %c0_14, %c0_15], %44 {strides = array<i32>} : memref<1x4x2xf32, #tpu.memory_space<vmem>>, vector<1x4x1xf32>,
    %c0_16 = arith.constant 0 : index
    %c0_17 = arith.constant 0 : index
    %c1 = arith.constant 1 : index
    %45 = vector.load %arg4[%c0_16, %c0_17, %c1] : memref<1x4x2xf32, #tpu.memory_space<vmem>>, vector<1x4x1xf32>
    %46 = vector.shape_cast %45 : vector<1x4x1xf32> to vector<4x1xf32>
    %cst_18 = arith.constant dense<0.000000e+00> : vector<4xf32>
    %47 = vector.multi_reduction <add>, %36, %cst_18 [1] : vector<4x256xf32> to vector<4xf32>
    %48 = vector.shape_cast %47 : vector<4xf32> to vector<4x1xf32>
    %49 = arith.addf %46, %48 : vector<4x1xf32>
    %c0_19 = arith.constant 0 : index
    %c0_20 = arith.constant 0 : index
    %c1_21 = arith.constant 1 : index
    %50 = vector.load %arg4[%c0_19, %c0_20, %c1_21] : memref<1x4x2xf32, #tpu.memory_space<vmem>>, vector<1x4x1xf32>
    %51 = vector.shape_cast %50 : vector<1x4x1xf32> to vector<4x1xf32>
    %52 = vector.shape_cast %49 : vector<4x1xf32> to vector<1x4x1xf32>
    tpu.vector_store %arg4[%c0_19, %c0_20, %c1_21], %52 {strides = array<i32>} : memref<1x4x2xf32, #tpu.memory_space<vmem>>, vector<1x4x1xf32>,
    return
  }
  func.func @transform_0(%arg0: i32, %arg1: i32) -> (i32, i32, i32) {
    %c0_i32 = arith.constant 0 : i32
    %c0_i32_0 = arith.constant 0 : i32
    return %arg0, %c0_i32, %arg1 : i32, i32, i32
  }
  func.func @transform_1(%arg0: i32, %arg1: i32) -> (i32, i32, i32) {
    %c0_i32 = arith.constant 0 : i32
    %c0_i32_0 = arith.constant 0 : i32
    return %arg0, %c0_i32, %arg1 : i32, i32, i32
  }
  func.func @transform_2(%arg0: i32, %arg1: i32) -> (i32, i32, i32) {
    %c0_i32 = arith.constant 0 : i32
    %c0_i32_0 = arith.constant 0 : i32
    %c0_i32_1 = arith.constant 0 : i32
    return %arg0, %c0_i32, %c0_i32_0 : i32, i32, i32
  }
}

</mosaic_0001>

<llo_original>
// kernel: tpu_custom_call.1
$region0: #{tpu_custom_call.1}
  #allocation0 [shape = 'u32[]', space=smem, size = 0x4, offset = 0x4, fixed_abs, tag = 'smem constant byte address 0x4 - core index']
  #allocation1 [shape = 'u32[72,128]{1,0:T(1,128)}', space=vmem, size = 0x9000, scoped, tag = 'internal scratch']
  %s0 = inlined_call_operand.hbm [shape: f32[2,4,256], index: 0, kind: input, shape index: {}]
  %s1 = inlined_call_operand.hbm [shape: s32[2,1,256], index: 1, kind: input, shape index: {}]
  %s2 = inlined_call_operand.vmem [shape: f32[2,4,2], index: 2, kind: output, shape index: {}]
  %s3 = sld [smem:[#allocation0]]
  $region53: #{tpu_custom_call.1} parent=0
    _
  %s5 = ssub.s32 1, %s3
  %s6 = scalar_select 0, %s5, %s3
  $region1: #{tpu_custom_call.1} parent=0
    #allocation2 [shape = 'u8[8192]{0}', space=vmem, size = 0x2000, scoped, tag = 'input window, operand 0']
    #allocation3 [shape = 's32[2]{0}', space=sflag, size = 0x8, scoped, tag = 'scoped memory for tpu_custom_call.1']
    #allocation4 [shape = 'u8[2048]{0}', space=vmem, size = 0x800, scoped, tag = 'input window, operand 1']
    #allocation5 [shape = 's32[2]{0}', space=sflag, size = 0x8, scoped, tag = 'scoped memory for tpu_custom_call.1']
    %7 = vsyncpa [#allocation3], 0
    %s8 = scalar_lea.sflag [#allocation3], 1
    %9 = vsyncpa %s8, 0
    %10 = vsyncpa [#allocation5], 0
    %s11 = scalar_lea.sflag [#allocation5], 1
    %12 = vsyncpa %s11, 0
    loop: start=0, step=1, limit=4
    $region2: #{tpu_custom_call.1} parent=1 // loop_pre_header
      _
    $region3: #{tpu_custom_call.1} parent=1 // loop_header
      %s14 = sphi 0, %s18
      %p15 = scmp.ge.s32.totalorder %s14, 4
      %s21 = sphi 0, %s33
      %s22 = sphi 0, %s29
      %s23 = sphi 0, %s21
      %s24 = sphi 0, %s22
      %s25 = sphi 0, %s23
      %s26 = sphi 0, %s24
      %s38 = sphi 0, %s40
      %s41 = sphi 0, %s38
      %s42 = sphi 0, %s41
      %s58 = sphi 0, %s42
      %s66 = sphi 0, %s68
      %s69 = sphi 0, %s66
      %s70 = sphi 0, %s69
      %s86 = sphi 0, %s70
      %s92 = sphi 0, %s94
      %s95 = sphi 0, %s92
      %s96 = sphi 0, %s95
      %s112 = sphi 0, %s96
    $region4: #{tpu_custom_call.1} parent=1 // loop_header_branch
      %17 = sbr.rel (%p15) target = $region8
    $region5: #{tpu_custom_call.1} parent=1 // loop_body
      %s19 = ssub.s32 %s14, 1
      %s20 = ssub.s32 %s14, 2
      %s27 = sadd.s32 1, %s22
      %p28 = scmp.ge.s32.totalorder %s27, 1
      %s29 = scalar_select %p28, 0, %s27
      %s30 = sadd.s32 1, %s21
      %s31 = scalar_select %p28, %s30, %s21
      %p32 = scmp.ge.s32.totalorder %s31, 2
      %s33 = scalar_select %p32, 0, %s31
      %s34 = ssub.s32 %s21, %s33
      %s35 = ssub.s32 %s22, %s29
      %s36 = sor.u32 %s34, %s35
      %p37 = scmp.eq.s32.totalorder %s36, 0
      %s39 = sadd.s32 %s38, 1
      %s40 = scalar_select %p37, %s38, %s39
      %p43 = pneg %p37
      %p44 = scmp.eq.s32.totalorder %s14, 1
      %p45 = por %p43, %p44
      %p46 = scmp.ne.s32.totalorder %s38, %s41
      %p47 = scmp.eq.s32.totalorder %s14, 0
      %p48 = por %p46, %p47
      %p49 = scmp.ne.s32.totalorder %s38, %s41
      %p50 = scmp.eq.s32.totalorder %s19, 1
      %p51 = por %p49, %p50
      %p52 = scmp.ne.s32.totalorder %s41, %s42
      %p53 = scmp.eq.s32.totalorder %s19, 0
      %p54 = por %p52, %p53
      %p55 = scmp.ne.s32.totalorder %s41, %s42
      %p56 = scmp.eq.s32.totalorder %s20, 1
      %p57 = por %p55, %p56
      %p59 = scmp.ne.s32.totalorder %s42, %s58
      %p60 = scmp.eq.s32.totalorder %s20, 0
      %p61 = por %p59, %p60
      %s62 = ssub.s32 %s21, %s33
      %s63 = ssub.s32 %s22, %s29
      %s64 = sor.u32 %s62, %s63
      %p65 = scmp.eq.s32.totalorder %s64, 0
      %s67 = sadd.s32 %s66, 1
      %s68 = scalar_select %p65, %s66, %s67
      %p71 = pneg %p65
      %p72 = scmp.eq.s32.totalorder %s14, 1
      %p73 = por %p71, %p72
      %p74 = scmp.ne.s32.totalorder %s66, %s69
      %p75 = scmp.eq.s32.totalorder %s14, 0
      %p76 = por %p74, %p75
      %p77 = scmp.ne.s32.totalorder %s66, %s69
      %p78 = scmp.eq.s32.totalorder %s19, 1
      %p79 = por %p77, %p78
      %p80 = scmp.ne.s32.totalorder %s69, %s70
      %p81 = scmp.eq.s32.totalorder %s19, 0
      %p82 = por %p80, %p81
      %p83 = scmp.ne.s32.totalorder %s69, %s70
      %p84 = scmp.eq.s32.totalorder %s20, 1
      %p85 = por %p83, %p84
      %p87 = scmp.ne.s32.totalorder %s70, %s86
      %p88 = scmp.eq.s32.totalorder %s20, 0
      %p89 = por %p87, %p88
      %s90 = ssub.s32 %s21, %s33
      %p91 = scmp.eq.s32.totalorder %s90, 0
      %s93 = sadd.s32 %s92, 1
      %s94 = scalar_select %p91, %s92, %s93
      %p97 = pneg %p91
      %p98 = scmp.eq.s32.totalorder %s14, 1
      %p99 = por %p97, %p98
      %p100 = scmp.ne.s32.totalorder %s92, %s95
      %p101 = scmp.eq.s32.totalorder %s14, 0
      %p102 = por %p100, %p101
      %p103 = scmp.ne.s32.totalorder %s92, %s95
      %p104 = scmp.eq.s32.totalorder %s19, 1
      %p105 = por %p103, %p104
      %p106 = scmp.ne.s32.totalorder %s95, %s96
      %p107 = scmp.eq.s32.totalorder %s19, 0
      %p108 = por %p106, %p107
      %p109 = scmp.ne.s32.totalorder %s95, %s96
      %p110 = scmp.eq.s32.totalorder %s20, 1
      %p111 = por %p109, %p110
      %p113 = scmp.ne.s32.totalorder %s96, %s112
      %p114 = scmp.eq.s32.totalorder %s20, 0
      %p115 = por %p113, %p114
      %p116 = scmp.le.s32.totalorder 1, %s14
      %p117 = scmp.lt.s32.totalorder %s14, 3
      %p118 = pnand %p116, %p117
      %p119 = pneg %p118
      // Predicated region
      $region9: #{tpu_custom_call.1} parent=5 // pred_check
        _
      $region10: #{tpu_custom_call.1} parent=5 // pred_check_branch
        %121 = sbr.rel (%p118) target = $region12
      $region11: #{tpu_custom_call.1} parent=5 // pred_region
        %s122 = ssub.s32 %s14, 1
      $region12: #{tpu_custom_call.1} parent=5 // pred_fallthru
        _
      %p123 = scmp.lt.s32.totalorder %s14, 2
      // Predicated region
      $region13: #{tpu_custom_call.1} parent=5 // pred_check
        %p124 = pneg %p123
      $region14: #{tpu_custom_call.1} parent=5 // pred_check_branch
        %126 = sbr.rel (%p124) target = $region16
      $region15: #{tpu_custom_call.1} parent=5 // pred_region
        // Predicated region
        $region17: #{tpu_custom_call.1} parent=15 // pred_check
          %p127 = pneg %p48
        $region18: #{tpu_custom_call.1} parent=15 // pred_check_branch
          %129 = sbr.rel (%p127) target = $region20
        $region19: #{tpu_custom_call.1} parent=15 // pred_region
          %s130 = sand.u32 %s38, 1
          %s131 = scalar_lea.sflag [#allocation3], %s130
          %s132 = sand.u32 %s38, 1
          %s133 = smul.addr %s132, 8
          %s134 = scalar_lea.vmem [#allocation2], %s133
          %s135 = smul.u32 2, %s22
          %137 = vsyncadd %s131, 0
          %s138 = smul.addr %s21, 2
          %s139 = sadd.s32 %s135, %s138
          %s140 = smul.addr %s139, 4
          %s141 = scalar_lea.hbm %s0, %s140
          %s143 = sshll.u32 %s141, 4
          %s144 = int_to_ptr.hbm [resolvable:$true] %s143
          %s145 = sshll.u32 %s134, 4
          %s146 = int_to_ptr.vmem [resolvable:$true] %s145
          %148 = dma.hbm_to_vmem [thread:$0]  %s144, 128, %s146, %s131
        $region20: #{tpu_custom_call.1} parent=15 // pred_fallthru
          _
        // Predicated region
        $region21: #{tpu_custom_call.1} parent=15 // pred_check
          %p149 = pneg %p76
        $region22: #{tpu_custom_call.1} parent=15 // pred_check_branch
          %151 = sbr.rel (%p149) target = $region24
        $region23: #{tpu_custom_call.1} parent=15 // pred_region
          %s152 = sand.u32 %s66, 1
          %s153 = scalar_lea.sflag [#allocation5], %s152
          %s154 = sand.u32 %s66, 1
          %s155 = smul.addr %s154, 2
          %s156 = scalar_lea.vmem [#allocation4], %s155
          %s157 = smul.u32 2, %s22
          %159 = vsyncadd %s153, 0
          %s160 = smul.addr %s21, 2
          %s161 = sadd.s32 %s157, %s160
          %s162 = scalar_lea.hbm %s1, %s161
          %s164 = sshll.u32 %s162, 4
          %s165 = int_to_ptr.hbm [resolvable:$true] %s164
          %s166 = sshll.u32 %s156, 4
          %s167 = int_to_ptr.vmem [resolvable:$true] %s166
          %169 = dma.hbm_to_vmem [thread:$0]  %s165, 32, %s167, %s153
        $region24: #{tpu_custom_call.1} parent=15 // pred_fallthru
          _
      $region16: #{tpu_custom_call.1} parent=5 // pred_fallthru
        _
      %p170 = scmp.le.s32.totalorder 1, %s14
      %p171 = scmp.lt.s32.totalorder %s14, 3
      %p172 = pnand %p170, %p171
      %p173 = pneg %p172
      // Predicated region
      $region25: #{tpu_custom_call.1} parent=5 // pred_check
        _
      $region26: #{tpu_custom_call.1} parent=5 // pred_check_branch
        %175 = sbr.rel (%p172) target = $region28
      $region27: #{tpu_custom_call.1} parent=5 // pred_region
        %s176 = ssub.s32 %s14, 1
        %s177 = sand.u32 %s41, 1
        %s178 = scalar_lea.sflag [#allocation3], %s177
        %s179 = sand.u32 %s41, 1
        %s180 = smul.addr %s179, 8
        %s181 = scalar_lea.vmem [#allocation2], %s180
        // Predicated region
        $region29: #{tpu_custom_call.1} parent=27 // pred_check
          %p182 = pneg %p54
        $region30: #{tpu_custom_call.1} parent=27 // pred_check_branch
          %184 = sbr.rel (%p182) target = $region32
        $region31: #{tpu_custom_call.1} parent=27 // pred_region
          %186 = dma.done %s178, 128
        $region32: #{tpu_custom_call.1} parent=27 // pred_fallthru
          _
        %s187 = sand.u32 %s69, 1
        %s188 = scalar_lea.sflag [#allocation5], %s187
        %s189 = sand.u32 %s69, 1
        %s190 = smul.addr %s189, 2
        %s191 = scalar_lea.vmem [#allocation4], %s190
        // Predicated region
        $region33: #{tpu_custom_call.1} parent=27 // pred_check
          %p192 = pneg %p82
        $region34: #{tpu_custom_call.1} parent=27 // pred_check_branch
          %194 = sbr.rel (%p192) target = $region36
        $region35: #{tpu_custom_call.1} parent=27 // pred_region
          %196 = dma.done %s188, 32
        $region36: #{tpu_custom_call.1} parent=27 // pred_fallthru
          _
        %s197 = sand.u32 %s41, 1
        %s198 = scalar_lea.sflag [#allocation3], %s197
        %s199 = sand.u32 %s41, 1
        %s200 = smul.addr %s199, 8
        %s201 = scalar_lea.vmem [#allocation2], %s200
        %p202 = pneg %p54
        %p203 = pneg %p51
        %s204 = sand.u32 %s69, 1
        %s205 = scalar_lea.sflag [#allocation5], %s204
        %s206 = sand.u32 %s69, 1
        %s207 = smul.addr %s206, 2
        %s208 = scalar_lea.vmem [#allocation4], %s207
        %p209 = pneg %p82
        %p210 = pneg %p79
        %p211 = pneg %p108
        %p212 = pneg %p105
        %p213 = scmp.lt.s32.totalorder %s23, 1
        %s214 = scalar_select %p213, %s23, 1
        %s215 = smul.addr %s214, 4
        %s216 = scalar_lea.vmem %s2, %s215
        %s217 = smul.u32 2, %s24
        %s218 = smul.u32 2, %s24
        %p219 = scmp.lt.s32.totalorder %s23, 1
        %s220 = scalar_select %p219, %s23, 1
        %s221 = smul.addr %s220, 4
        %s222 = scalar_lea.vmem %s2, %s221
        %p223 = scmp.eq.s32.totalorder %s24, 0
        // Predicated region
        $region37: #{tpu_custom_call.1} parent=27 // pred_check
          %p224 = pneg %p223
        $region38: #{tpu_custom_call.1} parent=27 // pred_check_branch
          %226 = sbr.rel (%p224) target = $region40
        $region39: #{tpu_custom_call.1} parent=27 // pred_region
          %vm227 = vcmask 11264
          %228 = vst.msk [vmem:[%s222] sm:$0xf] %vm227, 0.0
        $region40: #{tpu_custom_call.1} parent=27 // pred_fallthru
          _
        %v229 = vld [vmem:[%s181] sm:$0xff]
        %v230 = vld [vmem:[%s191] sm:$0x3]
        %232 = vst [vmem:[#allocation1] ss:$2 sm:$0xff] %v229
        %v233 = vld.sshfl [vmem:[#allocation1] sm:$0xff pattern:$0x75316420]
        %v234 = vld.sshfl [vmem:[#allocation1 + $0x8] sm:$0xff pattern:$0x75316420]
        %vm237 = vcmask 1043456
        %v238 = vsel %vm237, %v233, -inf
        %v239 = vrot.slane %v238, 4
        %v240 = vmax.f32 %v238, %v239
        %v241 = vrot.slane %v240, 2
        %v242 = vmax.f32 %v240, %v241
        %v243 = vrot.slane %v242, 1
        %v244 = vmax.f32 %v242, %v243
        %v245 = vsel %vm237, %v234, -inf
        %v246 = vrot.slane %v245, 4
        %v247 = vmax.f32 %v245, %v246
        %v248 = vrot.slane %v247, 2
        %v249 = vmax.f32 %v247, %v248
        %v250 = vrot.slane %v249, 1
        %v251 = vmax.f32 %v249, %v250
        %v254 = vrot.slane %v251, 4
        %v255 = vsel %vm237, %v244, %v254
        %v257 = vsub.f32 %v229, %v255
        %v258 = vmul.f32 %v257, 1.442695
        %v259 = vpow.pop %v258
        %261 = vst [vmem:[#allocation1] ss:$2 sm:$0xff] %v259
        %v262 = vld.sshfl [vmem:[#allocation1] sm:$0xff pattern:$0x75316420]
        %v263 = vld.sshfl [vmem:[#allocation1 + $0x8] sm:$0xff pattern:$0x75316420]
        %v266 = vsel %vm237, %v262, 0.0
        %v267 = vrot.slane %v266, 4
        %v268 = vadd.f32 %v266, %v267
        %v269 = vrot.slane %v268, 2
        %v270 = vadd.f32 %v268, %v269
        %v271 = vrot.slane %v270, 1
        %v272 = vadd.f32 %v270, %v271
        %v273 = vsel %vm237, %v263, 0.0
        %v274 = vrot.slane %v273, 4
        %v275 = vadd.f32 %v273, %v274
        %v276 = vrot.slane %v275, 2
        %v277 = vadd.f32 %v275, %v276
        %v278 = vrot.slane %v277, 1
        %v279 = vadd.f32 %v277, %v278
        %v280 = vrcp.pop %v272
        %v281 = vrcp.pop %v279
        %v282 = vmul.f32 %v272, %v280
        %v283 = vmul.f32 %v279, %v281
        %v284 = vsub.f32 2.0, %v282
        %v285 = vsub.f32 2.0, %v283
        %v286 = vmul.f32 %v280, %v284
        %v287 = vmul.f32 %v281, %v285
        %v290 = vrot.slane %v287, 4
        %v291 = vsel %vm237, %v286, %v290
        %v293 = vmul.f32 %v259, %v291
        %v294 = vlaneseq
        %v295 = vshrl.u32 %v294, 7
        %v296 = vperm.slane %v230, 0
        %v297 = vperm.slane %v230, 1
        %vm298 = vcmp.eq.s32.totalorder %v296, %v295
        %vm299 = vcmp.eq.s32.totalorder %v297, %v295
        %301 = vst [vmem:[#allocation1] ss:$2 sm:$0xff] %v293
        %v302 = vld.sshfl [vmem:[#allocation1] sm:$0xff pattern:$0x75316420]
        %v303 = vld.sshfl [vmem:[#allocation1 + $0x8] sm:$0xff pattern:$0x75316420]
        %v306 = vsel %vm298, %v302, 0.0
        %v307 = vsel %vm299, %v303, 0.0
        %v308 = vadd.f32 %v306, 0.0
        %v309 = vadd.f32 %v307, 0.0
        %v310 = vmul.f32 %v293, %v293
        %v311 = vsel %vm298, 1, 0
        %v312 = vsel %vm299, 1, 0
        %v313 = vcvt.s32.f32 %v311
        %v314 = vcvt.s32.f32 %v312
        %v317 = vrot.slane %v314, 4
        %v318 = vsel %vm237, %v313, %v317
        %v320 = vadd.f32 %v310, %v318
        %v321 = vadd.f32 %v320, 0.0
        %v322 = vld [vmem:[%s222] sm:$0xf]
        %v323 = vsel %vm237, %v308, 0.0
        %v324 = vsel %vm237, %v309, 0.0
        %v325 = vadd.f32 %v323, %v324
        %326 = vadd.xlane.f32.xlu0 %v325
        %v327 = vpop.xlane.xlu0 %326
        %v328 = vadd.f32 %v322, %v327
        %vm329 = vcmask 3072
        %330 = vst.msk [vmem:[%s222] sm:$0xf] %vm329, %v328
        %v331 = vld [vmem:[%s222] sm:$0xf]
        %333 = vst [vmem:[#allocation1] ss:$2 sm:$0xff] %v321
        %v334 = vld.sshfl [vmem:[#allocation1] sm:$0xff pattern:$0x75316420]
        %v335 = vld.sshfl [vmem:[#allocation1 + $0x8] sm:$0xff pattern:$0x75316420]
        %v338 = vsel %vm237, %v334, 0.0
        %v339 = vsel %vm237, %v335, 0.0
        %v340 = vadd.f32 %v338, %v339
        %341 = vadd.xlane.f32.xlu0 %v340
        %v342 = vpop.xlane.xlu0 %341
        %v343 = vadd.f32 %v331, %v342
        %vm344 = vcmask 11272
        %345 = vst.msk [vmem:[%s222] sm:$0xf] %vm344, %v343
        %p346 = scmp.lt.s32.totalorder %s23, 1
        %s347 = scalar_select %p346, %s23, 1
        %s348 = smul.addr %s347, 4
        %s349 = scalar_lea.vmem %s2, %s348
        // Predicated region
        $region41: #{tpu_custom_call.1} parent=27 // pred_check
          %p350 = pneg %p105
        $region42: #{tpu_custom_call.1} parent=27 // pred_check_branch
          %352 = sbr.rel (%p350) target = $region44
        $region43: #{tpu_custom_call.1} parent=27 // pred_region
          _
        $region44: #{tpu_custom_call.1} parent=27 // pred_fallthru
          _
      $region28: #{tpu_custom_call.1} parent=5 // pred_fallthru
        _
      %p353 = scmp.le.s32.totalorder 2, %s14
      // Predicated region
      $region45: #{tpu_custom_call.1} parent=5 // pred_check
        %p354 = pneg %p353
      $region46: #{tpu_custom_call.1} parent=5 // pred_check_branch
        %356 = sbr.rel (%p354) target = $region48
      $region47: #{tpu_custom_call.1} parent=5 // pred_region
        %s357 = ssub.s32 %s14, 2
        // Predicated region
        $region49: #{tpu_custom_call.1} parent=47 // pred_check
          %p358 = pneg %p111
        $region50: #{tpu_custom_call.1} parent=47 // pred_check_branch
          %360 = sbr.rel (%p358) target = $region52
        $region51: #{tpu_custom_call.1} parent=47 // pred_region
          %p361 = scmp.lt.s32.totalorder %s25, 1
          %s362 = scalar_select %p361, %s25, 1
          %s363 = smul.addr %s362, 4
          %s364 = scalar_lea.vmem %s2, %s363
        $region52: #{tpu_custom_call.1} parent=47 // pred_fallthru
          _
      $region48: #{tpu_custom_call.1} parent=5 // pred_fallthru
        _
    $region6: #{tpu_custom_call.1} parent=1 // loop_footer
      %s18 = sadd.s32 1, %s14
    $region7: #{tpu_custom_call.1} parent=1 // loop_footer_branch
      %13 = sbr.rel target = $region3
    $region8: #{tpu_custom_call.1} parent=1 // loop_exit
      _
    %365 = vsyncpa [#allocation3], 1
    %s366 = scalar_lea.sflag [#allocation3], 1
    %367 = vsyncpa %s366, 1
    %368 = vsyncpa [#allocation5], 1
    %s369 = scalar_lea.sflag [#allocation5], 1
    %370 = vsyncpa %s369, 1

</llo_original>
